<compile_context>
chip_gen: v6e
topology: v6e:2x2x1
jax: 0.10.0
libtpu: 0.0.40
codegen_flags: <defaults>
</compile_context>

<pallas_src>
from functools import partial

import jax
import jax.numpy as jnp
from jax.experimental import pallas as pl
from jax.experimental.pallas import tpu as pltpu

NEG_INF = -1e30


def _round_up(x, m):
    return ((x + m - 1) // m) * m


def _head_kernel(x_ref, wd_ref, p_ref, wc_ref, bc_ref, tgt_ref, *out_refs,
                 batch, tile_m, eps, with_logits):
    """One batch tile: dense -> ReLU -> LayerNorm -> classifier -> per-tile NLL sum."""
    # ---- BertPredictionHeadTransform.dense + ReLU (bf16 MXU operands, f32 acc) ----
    p = p_ref[...]                                   # (8, H): [b_dense; gamma; beta; ...]
    h = jnp.dot(x_ref[...], wd_ref[...], preferred_element_type=jnp.float32)
    h = jnp.maximum(h + p[0:1, :], 0.0)

    # ---- LayerNorm: one reduction pass (var = E[x^2] - mean^2), fused affine + cast.
    # All math in f32; ReLU'd O(1) activations -> no cancellation concern.
    hidden = h.shape[-1]
    mean = jnp.sum(h, axis=-1, keepdims=True) * (1.0 / hidden)
    ex2 = jnp.sum(h * h, axis=-1, keepdims=True) * (1.0 / hidden)
    inv = jax.lax.rsqrt(ex2 - mean * mean + eps)
    h16 = (((h - mean) * inv) * p[1:2, :] + p[2:3, :]).astype(jnp.bfloat16)

    # ---- classifier linear; padded-label mask is baked into bc (-1e30 columns) ----
    logits = jnp.dot(h16, wc_ref[...], preferred_element_type=jnp.float32) + bc_ref[...]

    # ---- per-row NLL = lse - logit[target]  (no full log-softmax materialized) ----
    m = jnp.max(logits, axis=-1, keepdims=True)
    lse = jnp.log(jnp.sum(jnp.exp(logits - m), axis=-1, keepdims=True)) + m
    col = jax.lax.broadcasted_iota(jnp.int32, logits.shape, 1)
    picked = jnp.sum(jnp.where(col == tgt_ref[...], logits, 0.0),
                     axis=-1, keepdims=True)
    nll = lse - picked                                       # [TM, 1]

    # ---- mask padded batch rows, reduce to a single partial sum per tile ----
    row = jax.lax.broadcasted_iota(jnp.int32, nll.shape, 0) + pl.program_id(0) * tile_m
    tile_sum = jnp.sum(jnp.where(row < batch, nll, 0.0))     # scalar f32

    if with_logits:
        logits_ref, nll_ref = out_refs
        logits_ref[...] = logits
    else:
        (nll_ref,) = out_refs
    # Lane-dense splat store (full (8,128) tile) -> no masked vst epilogue.
    nll_ref[...] = jnp.broadcast_to(tile_sum, nll_ref.shape).astype(jnp.float32)


def bert_head_forward(cls_hidden, w_dense, b_dense, ln_gamma, ln_beta,
                      w_cls, b_cls, target, *, tm=1024, eps=1e-12,
                      return_logits=True):
    """Fused phead + classifier + CrossEntropy. Weight matrices stored [in, out]."""
    B, H = cls_hidden.shape
    L = w_cls.shape[1]
    LP = _round_up(max(L, 128), 128)          # lane-dense classifier output width

    # --- batch tiling: large tiles amortize per-grid-step overhead, but cap TM so
    # bigger batches always produce >= 2 tiles (v7x dual-TC sharding + pipelining).
    # TM is kept a multiple of 16 for clean bf16 sublane packing.
    B16 = _round_up(B, 16)
    TM = min(tm, B16)
    if B16 >= 256:
        TM = min(TM, _round_up((B16 + 1) // 2, 16))
    TM = max(16, _round_up(TM, 16))
    B_pad = _round_up(B, TM)
    n_tiles = B_pad // TM

    # --- operands: bf16 matmul inputs, f32 everything else. Skip the extra HBM
    # pad pass whenever B already tiles evenly (common large-batch case).
    x = cls_hidden.astype(jnp.bfloat16)
    tgt = target.astype(jnp.int32).reshape(B, 1)
    if B_pad != B:
        x = jnp.zeros((B_pad, H), jnp.bfloat16).at[:B].set(x)
        tgt = jnp.zeros((B_pad, 1), jnp.int32).at[:B].set(tgt)

    wd = w_dense.astype(jnp.bfloat16)
    # One resident packed param block instead of three separate (1,H) blocks.
    params = (jnp.zeros((8, H), jnp.float32)
              .at[0].set(b_dense.astype(jnp.float32))
              .at[1].set(ln_gamma.astype(jnp.float32))
              .at[2].set(ln_beta.astype(jnp.float32)))
    wc = jnp.zeros((H, LP), jnp.bfloat16).at[:, :L].set(w_cls.astype(jnp.bfloat16))
    # Bake the padded-label mask into the classifier bias: exp(-1e30 - m) -> 0.
    bc = jnp.full((1, LP), NEG_INF, jnp.float32).at[:, :L].set(
        b_cls.astype(jnp.float32).reshape(1, L))

    # --- VMEM budget: resident weights + double-buffered streaming tiles + in-kernel
    # f32/bf16 intermediates + headroom, capped at ~45% of physical VMEM.
    phys_vmem = 64 << 20                       # conservative (v7x) fallback
    try:
        phys_vmem = int(getattr(pltpu.get_tpu_info(), "vmem_capacity_bytes", phys_vmem))
    except Exception:
        pass
    weight_bytes = (H * H + H * LP) * 2 + (8 * H + LP) * 4
    stream_bytes = TM * H * 2 + TM * 128 * 4 + 8 * 128 * 4   # x, targets (lane-padded), nll
    if return_logits:
        stream_bytes += TM * LP * 4
    interm_bytes = TM * H * 4 + TM * H * 2 + 3 * TM * LP * 4 + 4 * TM * 128 * 4
    vmem_needed = 2 * weight_bytes + 2 * stream_bytes + interm_bytes + (4 << 20)
    vmem_limit = int(min(max(vmem_needed, 16 << 20), int(0.45 * phys_vmem)))

    flops = int(2 * B_pad * H * (H + LP) + 10 * B_pad * H)
    transcendentals = int(B_pad * (LP + 2))
    bytes_accessed = int(B_pad * H * 2 + (H * H + H * LP) * 2 + (8 * H + LP) * 4
                         + B_pad * 4 + n_tiles * 8 * 128 * 4
                         + (B_pad * LP * 4 if return_logits else 0))

    resident = lambda i: (0, 0)    # weights / biases: DMA'd once, stay VMEM-resident
    stream = lambda i: (i, 0)      # activations / outputs: streamed per batch tile

    in_specs = [
        pl.BlockSpec((TM, H), stream),     # cls_hidden (bf16)
        pl.BlockSpec((H, H), resident),    # w_dense (bf16)
        pl.BlockSpec((8, H), resident),    # packed [b_dense; ln_gamma; ln_beta] (f32)
        pl.BlockSpec((H, LP), resident),   # w_cls, lane-padded (bf16)
        pl.BlockSpec((1, LP), resident),   # b_cls, padded cols = -1e30 (f32)
        pl.BlockSpec((TM, 1), stream),     # targets (int32)
    ]
    nll_spec = pl.BlockSpec((1, 8, 128), lambda i: (i, 0, 0))
    nll_shape = jax.ShapeDtypeStruct((n_tiles, 8, 128), jnp.float32)
    common = dict(
        grid=(n_tiles,),
        in_specs=in_specs,
        compiler_params=pltpu.CompilerParams(
            dimension_semantics=("parallel",),
            vmem_limit_bytes=vmem_limit),
        cost_estimate=pl.CostEstimate(flops=flops,
                                      transcendentals=transcendentals,
                                      bytes_accessed=bytes_accessed),
    )
    kern = partial(_head_kernel, batch=B, tile_m=TM, eps=eps,
                   with_logits=return_logits)

    if return_logits:
        logits_pad, nll_part = pl.pallas_call(
            kern,
            out_specs=(pl.BlockSpec((TM, LP), stream), nll_spec),
            out_shape=(jax.ShapeDtypeStruct((B_pad, LP), jnp.float32), nll_shape),
            **common,
        )(x, wd, params, wc, bc, tgt)
        logits = logits_pad[:B, :L]
    else:
        # Loss-only path: drop the f32 logits writeback entirely.
        nll_part = pl.pallas_call(
            kern, out_specs=nll_spec, out_shape=nll_shape, **common,
        )(x, wd, params, wc, bc, tgt)
        logits = None

    loss = jnp.sum(nll_part[:, 0, 0]) * (1.0 / B)   # tiny host-side reduce (n_tiles values)
    return logits, loss, {"Loss": loss}


def _reference(cls_hidden, w_dense, b_dense, ln_gamma, ln_beta, w_cls, b_cls,
               target, eps=1e-12):
    # Mirrors the kernel numerics: bf16 matmul operands, f32 math, E[x^2]-mean^2 LN.
    h = jnp.dot(cls_hidden.astype(jnp.bfloat16), w_dense.astype(jnp.bfloat16),
                preferred_element_type=jnp.float32)
    h = jnp.maximum(h + b_dense[None, :], 0.0)
    H = h.shape[-1]
    mean = jnp.sum(h, -1, keepdims=True) * (1.0 / H)
    ex2 = jnp.sum(h * h, -1, keepdims=True) * (1.0 / H)
    inv = jax.lax.rsqrt(ex2 - mean * mean + eps)
    h16 = (((h - mean) * inv) * ln_gamma[None, :] + ln_beta[None, :]).astype(jnp.bfloat16)
    logits = jnp.dot(h16, w_cls.astype(jnp.bfloat16),
                     preferred_element_type=jnp.float32) + b_cls[None, :]
    logp = jax.nn.log_softmax(logits, axis=-1)
    loss = -jnp.take_along_axis(logp, target[:, None], axis=-1).mean()
    return logits, loss


def _make_case(key, B, H, L):
    k1, k2, k3, k4, k5 = jax.random.split(key, 5)
    bound = 1.0 / (H ** 0.5)
    cls_hidden = jax.random.normal(k1, (B, H), jnp.float32)
    w_dense = jax.random.uniform(k2, (H, H), jnp.float32, -bound, bound)   # [in, out]
    b_dense = jax.random.uniform(k3, (H,), jnp.float32, -bound, bound)
    ln_gamma = jnp.ones((H,), jnp.float32)
    ln_beta = jnp.zeros((H,), jnp.float32)
    w_cls = jax.random.uniform(k4, (H, L), jnp.float32, -bound, bound)     # [in, out]
    b_cls = jnp.zeros((L,), jnp.float32)     # classifier bias constant-initialized to 0.0
    target = jax.random.randint(k5, (B,), 0, L)
    return cls_hidden, w_dense, b_dense, ln_gamma, ln_beta, w_cls, b_cls, target


if __name__ == "__main__":
    key = jax.random.PRNGKey(0)
    # Tolerances allow for bf16 double-rounding near ties and MXU vs XLA
    # accumulation-order differences; real bugs would be O(0.1+) off.
    ATOL, RTOL, LTOL = 5e-3, 5e-3, 2e-3

    # Case 1: tiny shapes (single tile, padded batch), logits + loss path.
    args1 = _make_case(jax.random.fold_in(key, 1), B=2, H=32, L=4)
    logits, loss, loss_dict = bert_head_forward(*args1)
    jax.block_until_ready((logits, loss))
    ref_logits, ref_loss = _reference(*args1)
    assert jnp.allclose(logits, ref_logits, atol=ATOL, rtol=RTOL), ("logits mismatch",
                                                                    logits, ref_logits)
    assert jnp.allclose(loss, ref_loss, atol=LTOL, rtol=LTOL), ("loss mismatch",
                                                                loss, ref_loss)
    assert jnp.allclose(loss_dict["Loss"], ref_loss, atol=LTOL, rtol=LTOL)

    # Case 1b: loss-only path (no logits writeback).
    _, loss_only, _ = bert_head_forward(*args1, return_logits=False)
    jax.block_until_ready(loss_only)
    assert jnp.allclose(loss_only, ref_loss, atol=LTOL, rtol=LTOL), (loss_only, ref_loss)

    # Case 2: ragged multi-tile batch (exercises in-kernel row masking + 2-tile grid).
    args2 = _make_case(jax.random.fold_in(key, 2), B=300, H=128, L=10)
    logits2, loss2, _ = bert_head_forward(*args2)
    jax.block_until_ready((logits2, loss2))
    ref_logits2, ref_loss2 = _reference(*args2)
    assert jnp.allclose(logits2, ref_logits2, atol=ATOL, rtol=RTOL), "logits mismatch (case 2)"
    assert jnp.allclose(loss2, ref_loss2, atol=LTOL, rtol=LTOL), (loss2, ref_loss2)

    print("KERNEL_OK")
</pallas_src>

<mosaic_0001>
module attributes {stable_mosaic.version = 11 : i64} {
  func.func @_head_kernel(%arg0: i32, %arg1: memref<16x32xbf16, #tpu.memory_space<vmem>>, %arg2: memref<32x32xbf16, #tpu.memory_space<vmem>>, %arg3: memref<8x32xf32, #tpu.memory_space<vmem>>, %arg4: memref<32x128xbf16, #tpu.memory_space<vmem>>, %arg5: memref<1x128xf32, #tpu.memory_space<vmem>>, %arg6: memref<16x1xi32, #tpu.memory_space<vmem>>, %arg7: memref<16x128xf32, #tpu.memory_space<vmem>>, %arg8: memref<1x8x128xf32, #tpu.memory_space<vmem>>) attributes {dimension_semantics = [#tpu.dimension_semantics<parallel>], iteration_bounds = array<i64: 1>, scalar_prefetch = 0 : i64, scratch_operands = 0 : i64, tpu.core_type = #tpu.core_type<tc>, window_params = [{transform_indices = @transform_0, window_bounds = array<i64: 16, 32>}, {pipeline_mode = #tpu.pipeline_mode<synchronous>, transform_indices = @transform_1, window_bounds = array<i64: 32, 32>}, {pipeline_mode = #tpu.pipeline_mode<synchronous>, transform_indices = @transform_2, window_bounds = array<i64: 8, 32>}, {pipeline_mode = #tpu.pipeline_mode<synchronous>, transform_indices = @transform_3, window_bounds = array<i64: 32, 128>}, {pipeline_mode = #tpu.pipeline_mode<synchronous>, transform_indices = @transform_4, window_bounds = array<i64: 1, 128>}, {transform_indices = @transform_5, window_bounds = array<i64: 16, 1>}, {transform_indices = @transform_6, window_bounds = array<i64: 16, 128>}, {transform_indices = @transform_7, window_bounds = array<i64: 1, 8, 128>}]} {
    %c0 = arith.constant 0 : index
    %c0_0 = arith.constant 0 : index
    %0 = vector.load %arg3[%c0, %c0_0] : memref<8x32xf32, #tpu.memory_space<vmem>>, vector<8x32xf32>
    %c0_1 = arith.constant 0 : index
    %c0_2 = arith.constant 0 : index
    %1 = vector.load %arg1[%c0_1, %c0_2] : memref<16x32xbf16, #tpu.memory_space<vmem>>, vector<16x32xbf16>
    %c0_3 = arith.constant 0 : index
    %c0_4 = arith.constant 0 : index
    %2 = vector.load %arg2[%c0_3, %c0_4] : memref<32x32xbf16, #tpu.memory_space<vmem>>, vector<32x32xbf16>
    %cst = arith.constant dense<0.000000e+00> : vector<16x32xf32>
    %3 = tpu.matmul %1, %2, %cst {dimension_numbers = #tpu.dot_dimension_numbers<[1], [0], [0], [1], [0, 0, 1, 1], [], []>} : vector<16x32xbf16>, vector<32x32xbf16>, vector<16x32xf32> -> vector<16x32xf32>
    %4 = vector.extract_strided_slice %0 {offsets = [0, 0], sizes = [1, 32], strides = [1, 1]} : vector<8x32xf32> to vector<1x32xf32>
    %5 = vector.broadcast %4 : vector<1x32xf32> to vector<16x32xf32>
    %6 = arith.addf %3, %5 : vector<16x32xf32>
    %cst_5 = arith.constant 0.000000e+00 : f32
    %7 = vector.broadcast %cst_5 : f32 to vector<16x32xf32>
    %8 = arith.maximumf %6, %7 : vector<16x32xf32>
    %cst_6 = arith.constant dense<0.000000e+00> : vector<16xf32>
    %9 = vector.multi_reduction <add>, %8, %cst_6 [1] : vector<16x32xf32> to vector<16xf32>
    %10 = vector.shape_cast %9 : vector<16xf32> to vector<16x1xf32>
    %cst_7 = arith.constant 3.125000e-02 : f32
    %11 = vector.broadcast %cst_7 : f32 to vector<16x1xf32>
    %12 = arith.mulf %10, %11 : vector<16x1xf32>
    %13 = arith.mulf %8, %8 : vector<16x32xf32>
    %cst_8 = arith.constant dense<0.000000e+00> : vector<16xf32>
    %14 = vector.multi_reduction <add>, %13, %cst_8 [1] : vector<16x32xf32> to vector<16xf32>
    %15 = vector.shape_cast %14 : vector<16xf32> to vector<16x1xf32>
    %cst_9 = arith.constant 3.125000e-02 : f32
    %16 = vector.broadcast %cst_9 : f32 to vector<16x1xf32>
    %17 = arith.mulf %15, %16 : vector<16x1xf32>
    %18 = arith.mulf %12, %12 : vector<16x1xf32>
    %19 = arith.subf %17, %18 : vector<16x1xf32>
    %cst_10 = arith.constant 9.99999996E-13 : f32
    %20 = vector.broadcast %cst_10 : f32 to vector<16x1xf32>
    %21 = arith.addf %19, %20 : vector<16x1xf32>
    %22 = math.rsqrt %21 : vector<16x1xf32>
    %23 = vector.broadcast %12 : vector<16x1xf32> to vector<16x32xf32>
    %24 = arith.subf %8, %23 : vector<16x32xf32>
    %25 = vector.broadcast %22 : vector<16x1xf32> to vector<16x32xf32>
    %26 = arith.mulf %24, %25 : vector<16x32xf32>
    %27 = vector.extract_strided_slice %0 {offsets = [1, 0], sizes = [1, 32], strides = [1, 1]} : vector<8x32xf32> to vector<1x32xf32>
    %28 = vector.broadcast %27 : vector<1x32xf32> to vector<16x32xf32>
    %29 = arith.mulf %26, %28 : vector<16x32xf32>
    %30 = vector.extract_strided_slice %0 {offsets = [2, 0], sizes = [1, 32], strides = [1, 1]} : vector<8x32xf32> to vector<1x32xf32>
    %31 = vector.broadcast %30 : vector<1x32xf32> to vector<16x32xf32>
    %32 = arith.addf %29, %31 : vector<16x32xf32>
    %33 = arith.truncf %32 : vector<16x32xf32> to vector<16x32xbf16>
    %c0_11 = arith.constant 0 : index
    %c0_12 = arith.constant 0 : index
    %34 = vector.load %arg4[%c0_11, %c0_12] : memref<32x128xbf16, #tpu.memory_space<vmem>>, vector<32x128xbf16>
    %cst_13 = arith.constant dense<0.000000e+00> : vector<16x128xf32>
    %35 = tpu.matmul %33, %34, %cst_13 {dimension_numbers = #tpu.dot_dimension_numbers<[1], [0], [0], [1], [0, 0, 1, 1], [], []>} : vector<16x32xbf16>, vector<32x128xbf16>, vector<16x128xf32> -> vector<16x128xf32>
    %c0_14 = arith.constant 0 : index
    %c0_15 = arith.constant 0 : index
    %36 = vector.load %arg5[%c0_14, %c0_15] : memref<1x128xf32, #tpu.memory_space<vmem>>, vector<1x128xf32>
    %37 = vector.broadcast %36 : vector<1x128xf32> to vector<16x128xf32>
    %38 = arith.addf %35, %37 : vector<16x128xf32>
    %cst_16 = arith.constant dense<0xFF800000> : vector<16xf32>
    %39 = vector.multi_reduction <maximumf>, %38, %cst_16 [1] : vector<16x128xf32> to vector<16xf32>
    %40 = vector.shape_cast %39 : vector<16xf32> to vector<16x1xf32>
    %41 = vector.broadcast %40 : vector<16x1xf32> to vector<16x128xf32>
    %42 = arith.subf %38, %41 : vector<16x128xf32>
    %43 = math.exp %42 : vector<16x128xf32>
    %cst_17 = arith.constant dense<0.000000e+00> : vector<16xf32>
    %44 = vector.multi_reduction <add>, %43, %cst_17 [1] : vector<16x128xf32> to vector<16xf32>
    %45 = vector.shape_cast %44 : vector<16xf32> to vector<16x1xf32>
    %46 = math.log %45 : vector<16x1xf32>
    %47 = arith.addf %46, %40 : vector<16x1xf32>
    %48 = tpu.iota {dimensions = array<i32: 1>} : vector<16x128xi32>
    %c0_18 = arith.constant 0 : index
    %c0_19 = arith.constant 0 : index
    %49 = vector.load %arg6[%c0_18, %c0_19] : memref<16x1xi32, #tpu.memory_space<vmem>>, vector<16x1xi32>
    %50 = vector.broadcast %49 : vector<16x1xi32> to vector<16x128xi32>
    %51 = arith.cmpi eq, %48, %50 : vector<16x128xi32>
    %cst_20 = arith.constant 0.000000e+00 : f32
    %52 = vector.broadcast %cst_20 : f32 to vector<16x128xf32>
    %53 = arith.select %51, %38, %52 : vector<16x128xi1>, vector<16x128xf32>
    %cst_21 = arith.constant dense<0.000000e+00> : vector<16xf32>
    %54 = vector.multi_reduction <add>, %53, %cst_21 [1] : vector<16x128xf32> to vector<16xf32>
    %55 = vector.shape_cast %54 : vector<16xf32> to vector<16x1xf32>
    %56 = arith.subf %47, %55 : vector<16x1xf32>
    %57 = tpu.iota {dimensions = array<i32: 0>} : vector<16x1xi32>
    %c16_i32 = arith.constant 16 : i32
    %58 = arith.muli %arg0, %c16_i32 : i32
    %59 = vector.broadcast %58 : i32 to vector<16x1xi32>
    %60 = arith.addi %57, %59 : vector<16x1xi32>
    %c2_i32 = arith.constant 2 : i32
    %61 = vector.broadcast %c2_i32 : i32 to vector<16x1xi32>
    %62 = arith.cmpi slt, %60, %61 : vector<16x1xi32>
    %cst_22 = arith.constant 0.000000e+00 : f32
    %63 = vector.broadcast %cst_22 : f32 to vector<16x1xf32>
    %64 = arith.select %62, %56, %63 : vector<16x1xi1>, vector<16x1xf32>
    %65 = vector.shape_cast %64 : vector<16x1xf32> to vector<1x16x1xf32>
    %cst_23 = arith.constant dense<0.000000e+00> : vector<1xf32>
    %66 = vector.multi_reduction <add>, %65, %cst_23 [1, 2] : vector<1x16x1xf32> to vector<1xf32>
    %67 = vector.shape_cast %66 : vector<1xf32> to vector<1x1x1xf32>
    %68 = vector.extract %67[0, 0, 0] : f32 from vector<1x1x1xf32>
    %c0_24 = arith.constant 0 : index
    %c0_25 = arith.constant 0 : index
    %69 = vector.load %arg7[%c0_24, %c0_25] : memref<16x128xf32, #tpu.memory_space<vmem>>, vector<16x128xf32>
    tpu.vector_store %arg7[%c0_24, %c0_25], %38 {strides = array<i32>} : memref<16x128xf32, #tpu.memory_space<vmem>>, vector<16x128xf32>,
    %70 = vector.broadcast %68 : f32 to vector<1x8x128xf32>
    %c0_26 = arith.constant 0 : index
    %c0_27 = arith.constant 0 : index
    %c0_28 = arith.constant 0 : index
    %71 = vector.load %arg8[%c0_26, %c0_27, %c0_28] : memref<1x8x128xf32, #tpu.memory_space<vmem>>, vector<1x8x128xf32>
    tpu.vector_store %arg8[%c0_26, %c0_27, %c0_28], %70 {strides = array<i32>} : memref<1x8x128xf32, #tpu.memory_space<vmem>>, vector<1x8x128xf32>,
    return
  }
  func.func @transform_0(%arg0: i32) -> (i32, i32) {
    %c0_i32 = arith.constant 0 : i32
    %c0_i32_0 = arith.constant 0 : i32
    return %arg0, %c0_i32 : i32, i32
  }
  func.func @transform_1(%arg0: i32) -> (i32, i32) {
    %c0_i32 = arith.constant 0 : i32
    %c0_i32_0 = arith.constant 0 : i32
    %c0_i32_1 = arith.constant 0 : i32
    return %c0_i32, %c0_i32_0 : i32, i32
  }
  func.func @transform_2(%arg0: i32) -> (i32, i32) {
    %c0_i32 = arith.constant 0 : i32
    %c0_i32_0 = arith.constant 0 : i32
    %c0_i32_1 = arith.constant 0 : i32
    return %c0_i32, %c0_i32_0 : i32, i32
  }
  func.func @transform_3(%arg0: i32) -> (i32, i32) {
    %c0_i32 = arith.constant 0 : i32
    %c0_i32_0 = arith.constant 0 : i32
    %c0_i32_1 = arith.constant 0 : i32
    return %c0_i32, %c0_i32_0 : i32, i32
  }
  func.func @transform_4(%arg0: i32) -> (i32, i32) {
    %c0_i32 = arith.constant 0 : i32
    %c0_i32_0 = arith.constant 0 : i32
    %c0_i32_1 = arith.constant 0 : i32
    return %c0_i32, %c0_i32_0 : i32, i32
  }
  func.func @transform_5(%arg0: i32) -> (i32, i32) {
    %c0_i32 = arith.constant 0 : i32
    %c0_i32_0 = arith.constant 0 : i32
    return %arg0, %c0_i32 : i32, i32
  }
  func.func @transform_6(%arg0: i32) -> (i32, i32) {
    %c0_i32 = arith.constant 0 : i32
    %c0_i32_0 = arith.constant 0 : i32
    return %arg0, %c0_i32 : i32, i32
  }
  func.func @transform_7(%arg0: i32) -> (i32, i32, i32) {
    %c0_i32 = arith.constant 0 : i32
    %c0_i32_0 = arith.constant 0 : i32
    %c0_i32_1 = arith.constant 0 : i32
    return %arg0, %c0_i32, %c0_i32_0 : i32, i32, i32
  }
}

</mosaic_0001>

<llo_original>
// kernel: tpu_custom_call.1
$region0: #{tpu_custom_call.1}
  #allocation0 [shape = 'u32[]', space=smem, size = 0x4, offset = 0x4, fixed_abs, tag = 'smem constant byte address 0x4 - core index']
  #allocation1 [shape = 'u32[144,128]{1,0:T(1,128)}', space=vmem, size = 0x12000, scoped, tag = 'internal scratch']
  %s0 = inlined_call_operand.hbm [shape: bf16[16,32], index: 0, kind: input, shape index: {}]
  %s1 = inlined_call_operand.vmem [shape: bf16[32,32], index: 1, kind: input, shape index: {}]
  %s2 = inlined_call_operand.hbm [shape: f32[8,32], index: 2, kind: input, shape index: {}]
  %s3 = inlined_call_operand.hbm [shape: bf16[32,128], index: 3, kind: input, shape index: {}]
  %s4 = inlined_call_operand.vmem [shape: f32[1,128], index: 4, kind: input, shape index: {}]
  %s5 = inlined_call_operand.vmem [shape: s32[16,1], index: 5, kind: input, shape index: {}]
  %s6 = inlined_call_operand.hbm [shape: f32[16,128], index: 6, kind: output, shape index: {0}]
  %s7 = inlined_call_operand.hbm [shape: f32[1,8,128], index: 7, kind: output, shape index: {1}]
  %8 = xla_tuple %s6, %s7
  %s9 = sld [smem:[#allocation0]]
  $region54: #{tpu_custom_call.1} parent=0
    _
  %s11 = ssub.s32 1, %s9
  %s12 = scalar_select 0, %s11, %s9
  $region1: #{tpu_custom_call.1} parent=0
    #allocation2 [shape = 'u8[4096]{0}', space=vmem, size = 0x1000, scoped, tag = 'input window, operand 0, single buffered']
    #allocation3 [shape = 's32[1]{0}', space=sflag, size = 0x4, scoped, tag = 'scoped memory for tpu_custom_call.1']
    #allocation4 [shape = 's32[1]{0}', space=sflag, size = 0x4, scoped, tag = 'scoped memory for tpu_custom_call.1']
    #allocation5 [shape = 'u8[4096]{0}', space=vmem, size = 0x1000, scoped, tag = 'input window, operand 2, single buffered']
    #allocation6 [shape = 's32[1]{0}', space=sflag, size = 0x4, scoped, tag = 'scoped memory for tpu_custom_call.1']
    #allocation7 [shape = 'u8[8192]{0}', space=vmem, size = 0x2000, scoped, tag = 'input window, operand 3, single buffered']
    #allocation8 [shape = 'u8[8192]{0}', space=vmem, size = 0x2000, scoped, tag = 'output window, operand 0, single buffered']
    #allocation9 [shape = 'u8[4096]{0}', space=vmem, size = 0x1000, scoped, tag = 'output window, operand 1, single buffered']
    #allocation10 [shape = 's32[1]{0}', space=sflag, size = 0x4, scoped, tag = 'scoped memory for tpu_custom_call.1']
    %13 = vsyncpa [#allocation3], 0
    %14 = vsyncpa [#allocation6], 0
    %15 = vsyncpa [#allocation4], 0
    %16 = vsyncpa [#allocation10], 0
    // Predicated region
    $region2: #{tpu_custom_call.1} parent=1 // pred_check
      _
    $region3: #{tpu_custom_call.1} parent=1 // pred_check_branch
      %18 = sbr.rel (0) target = $region5
    $region4: #{tpu_custom_call.1} parent=1 // pred_region
      %s20 = ssub.s32 128, 128
      %21 = vsyncadd [#allocation3], %s20
      %s22 = sshll.u32 [#allocation2], 4
      %s23 = int_to_ptr.vmem [resolvable:$true] %s22
      %28 = dma.hbm_to_vmem [thread:$0]  %s0, 128, %s23, [#allocation3], 64, 64, 4
    $region5: #{tpu_custom_call.1} parent=1 // pred_fallthru
      _
    // Predicated region
    $region6: #{tpu_custom_call.1} parent=1 // pred_check
      _
    $region7: #{tpu_custom_call.1} parent=1 // pred_check_branch
      %30 = sbr.rel (0) target = $region9
    $region8: #{tpu_custom_call.1} parent=1 // pred_region
      _
    $region9: #{tpu_custom_call.1} parent=1 // pred_fallthru
      _
    // Predicated region
    $region10: #{tpu_custom_call.1} parent=1 // pred_check
      _
    $region11: #{tpu_custom_call.1} parent=1 // pred_check_branch
      %32 = sbr.rel (0) target = $region13
    $region12: #{tpu_custom_call.1} parent=1 // pred_region
      %s34 = ssub.s32 128, 128
      %35 = vsyncadd [#allocation6], %s34
      %s37 = sshll.u32 [#allocation5], 4
      %s38 = int_to_ptr.vmem [resolvable:$true] %s37
      %40 = dma.hbm_to_vmem [thread:$0]  %s2, 128, %s38, [#allocation6]
    $region13: #{tpu_custom_call.1} parent=1 // pred_fallthru
      _
    // Predicated region
    $region14: #{tpu_custom_call.1} parent=1 // pred_check
      _
    $region15: #{tpu_custom_call.1} parent=1 // pred_check_branch
      %42 = sbr.rel (0) target = $region17
    $region16: #{tpu_custom_call.1} parent=1 // pred_region
      %s44 = ssub.s32 256, 256
      %45 = vsyncadd [#allocation6], %s44
      %s46 = sshll.u32 [#allocation7], 4
      %s47 = int_to_ptr.vmem [resolvable:$true] %s46
      %52 = dma.hbm_to_vmem [thread:$0]  %s3, 256, %s47, [#allocation6], 64, 64, 4
    $region17: #{tpu_custom_call.1} parent=1 // pred_fallthru
      _
    // Predicated region
    $region18: #{tpu_custom_call.1} parent=1 // pred_check
      _
    $region19: #{tpu_custom_call.1} parent=1 // pred_check_branch
      %54 = sbr.rel (0) target = $region21
    $region20: #{tpu_custom_call.1} parent=1 // pred_region
      _
    $region21: #{tpu_custom_call.1} parent=1 // pred_fallthru
      _
    // Predicated region
    $region22: #{tpu_custom_call.1} parent=1 // pred_check
      _
    $region23: #{tpu_custom_call.1} parent=1 // pred_check_branch
      %56 = sbr.rel (0) target = $region25
    $region24: #{tpu_custom_call.1} parent=1 // pred_region
      _
    $region25: #{tpu_custom_call.1} parent=1 // pred_fallthru
      _
    // Predicated region
    $region26: #{tpu_custom_call.1} parent=1 // pred_check
      _
    $region27: #{tpu_custom_call.1} parent=1 // pred_check_branch
      %58 = sbr.rel (0) target = $region29
    $region28: #{tpu_custom_call.1} parent=1 // pred_region
      %59 = dma.done [#allocation3], 128
    $region29: #{tpu_custom_call.1} parent=1 // pred_fallthru
      _
    // Predicated region
    $region30: #{tpu_custom_call.1} parent=1 // pred_check
      _
    $region31: #{tpu_custom_call.1} parent=1 // pred_check_branch
      %61 = sbr.rel (0) target = $region33
    $region32: #{tpu_custom_call.1} parent=1 // pred_region
      %62 = dma.done [#allocation6], 128
    $region33: #{tpu_custom_call.1} parent=1 // pred_fallthru
      _
    // Predicated region
    $region34: #{tpu_custom_call.1} parent=1 // pred_check
      _
    $region35: #{tpu_custom_call.1} parent=1 // pred_check_branch
      %64 = sbr.rel (0) target = $region37
    $region36: #{tpu_custom_call.1} parent=1 // pred_region
      %65 = dma.done [#allocation6], 256
    $region37: #{tpu_custom_call.1} parent=1 // pred_fallthru
      _
    %v67 = vld [vmem:[#allocation5] sm:$0xff]
    %v68 = vld [vmem:[#allocation2] sm:$0xf]
    %v69 = vld [vmem:[#allocation2 + $0x4] sm:$0xf]
    %v70 = vld [vmem:[%s1] sm:$0xf]
    %v71 = vld [vmem:[%s1 + $0x4] sm:$0xf]
    %v72 = vld [vmem:[%s1 + $0x8] sm:$0xf]
    %v73 = vld [vmem:[%s1 + $0xc] sm:$0xf]
    %v74 = vlaneseq
    %v75 = vshrl.u32 %v74, 7
    %v76 = vsub.s32 0, %v75
    %v77 = vrot.slane %v67, %v76
    %v80 = vunpack.c.l.b16 %v68
    %v81 = vunpack.c.l.b16 %v69
    %v82 = vpack.c.b16 %v81, %v80
    %v87 = vunpack.c.l.b16 %v70
    %v88 = vunpack.c.l.b16 %v71
    %v89 = vunpack.c.l.b16 %v72
    %v90 = vunpack.c.l.b16 %v73
    %v91 = vpack.c.b16 %v88, %v87
    %v92 = vpack.c.b16 %v90, %v89
    %vm95 = vcmask 261120
    %v97 = vsel %vm95, %v82, 0
    %99 = vmatprep.subr.bf16.mxu0 0
    %100 = vmatpush1.bf16.msra.mxu0 0
    %101 = vmatprep.subr.bf16.mxu0 0
    %102 = vmatpush1.bf16.msra.mxu0 0
    %103 = vmatprep.subr.bf16.mxu0 0
    %104 = vmatpush1.bf16.msra.mxu0 0
    %105 = vmatprep.subr.bf16.mxu0 0
    %106 = vmatpush1.bf16.msra.mxu0 0
    %107 = vmatprep.subr.bf16.mxu0 0
    %108 = vmatpush1.bf16.msra.mxu0 0
    %109 = vmatprep.subr.bf16.mxu0 0
    %110 = vmatpush1.bf16.msra.mxu0 0
    %111 = vmatprep.subr.bf16.mxu0 0
    %112 = vmatpush1.bf16.msra.mxu0 %v92
    %113 = vmatprep.subr.bf16.mxu0 0
    %114 = vmatpush1.bf16.msra.mxu0 %v91
    %115 = vmatprep.subr.bf16.mxu0 0
    %116 = vmatpush2.bf16.msra.mxu0 0
    %117 = vmatprep.subr.bf16.mxu0 0
    %118 = vmatpush2.bf16.msra.mxu0 0
    %119 = vmatprep.subr.bf16.mxu0 0
    %120 = vmatpush2.bf16.msra.mxu0 0
    %121 = vmatprep.subr.bf16.mxu0 0
    %122 = vmatpush2.bf16.msra.mxu0 0
    %123 = vmatprep.subr.bf16.mxu0 0
    %124 = vmatpush2.bf16.msra.mxu0 0
    %125 = vmatprep.subr.bf16.mxu0 0
    %126 = vmatpush2.bf16.msra.mxu0 0
    %127 = vmatprep.subr.bf16.mxu0 0
    %128 = vmatpush2.bf16.msra.mxu0 0
    %129 = vmatprep.subr.bf16.mxu0 0
    %130 = vmatpush2.bf16.msra.mxu0 0
    %131 = vmatprep.mubr.bf16.mxu0 0
    %132 = vmatmul.mubr.bf16.gmra.mxu0 %v97
    %v133 = vpop.f32.mrf.mxu0
    %v134 = vadd.f32 %v77, %v133
    %v135 = vpop.f32.mrf.mxu0
    %v136 = vpop.f32.mrf.mxu0
    %v137 = vadd.f32 %v77, %v136
    %v138 = vpop.f32.mrf.mxu0
    %139 = vdwg.mxu0
    %v140 = vmax.f32 %v134, 0.0
    %v141 = vmax.f32 %v137, 0.0
    %v142 = vsel %vm95, %v140, 0.0
    %143 = vadd.xlane.f32.xlu0 %v142
    %v144 = vpop.xlane.xlu0 %143
    %v145 = vsel %vm95, %v141, 0.0
    %146 = vadd.xlane.f32.xlu0 %v145
    %v147 = vpop.xlane.xlu0 %146
    %v148 = vmul.f32 %v144, 0.03125
    %v149 = vmul.f32 %v147, 0.03125
    %v150 = vmul.f32 %v140, %v140
    %v151 = vmul.f32 %v141, %v141
    %v152 = vsel %vm95, %v150, 0.0
    %153 = vadd.xlane.f32.xlu0 %v152
    %v154 = vpop.xlane.xlu0 %153
    %v155 = vsel %vm95, %v151, 0.0
    %156 = vadd.xlane.f32.xlu0 %v155
    %v157 = vpop.xlane.xlu0 %156
    %v158 = vmul.f32 %v154, 0.03125
    %v159 = vmul.f32 %v157, 0.03125
    %v160 = vmul.f32 %v148, %v148
    %v161 = vmul.f32 %v149, %v149
    %v162 = vsub.f32 %v158, %v160
    %v163 = vsub.f32 %v159, %v161
    %v164 = vadd.f32 %v162, 1e-12
    %v165 = vadd.f32 %v163, 1e-12
    %v166 = vrsqrt.pop %v164
    %v167 = vrsqrt.pop %v165
    %v168 = vsub.f32 %v140, %v148
    %v169 = vsub.f32 %v141, %v149
    %v170 = vmul.f32 %v168, %v166
    %v171 = vmul.f32 %v169, %v167
    %v172 = vlaneseq
    %v173 = vshrl.u32 %v172, 7
    %v174 = vsub.s32 1, %v173
    %v175 = vrot.slane %v67, %v174
    %v176 = vmul.f32 %v170, %v175
    %v177 = vmul.f32 %v171, %v175
    %v178 = vlaneseq
    %v179 = vshrl.u32 %v178, 7
    %v180 = vsub.s32 2, %v179
    %v181 = vrot.slane %v67, %v180
    %v182 = vadd.f32 %v176, %v181
    %v183 = vadd.f32 %v177, %v181
    %v184 = vpack.c.bf16 %v183, %v182
    %v185 = vld [vmem:[#allocation7] sm:$0xf]
    %v186 = vld [vmem:[#allocation7 + $0x4] sm:$0xf]
    %v187 = vld [vmem:[#allocation7 + $0x8] sm:$0xf]
    %v188 = vld [vmem:[#allocation7 + $0xc] sm:$0xf]
    %v189 = vld [vmem:[%s4] sm:$0x1]
    %v191 = vlaneseq
    %v192 = vshrl.u32 %v191, 7
    %v193 = vsub.s32 0, %v192
    %v194 = vrot.slane %v189, %v193
    %v200 = vunpack.c.l.b16 %v185
    %v201 = vunpack.c.l.b16 %v186
    %v202 = vunpack.c.l.b16 %v187
    %v203 = vunpack.c.l.b16 %v188
    %v204 = vpack.c.b16 %v201, %v200
    %v205 = vpack.c.b16 %v203, %v202
    %v209 = vsel %vm95, %v184, 0
    %211 = vmatprep.subr.bf16.mxu0 0
    %212 = vmatpush1.bf16.msra.mxu0 0
    %213 = vmatprep.subr.bf16.mxu0 0
    %214 = vmatpush1.bf16.msra.mxu0 0
    %215 = vmatprep.subr.bf16.mxu0 0
    %216 = vmatpush1.bf16.msra.mxu0 0
    %217 = vmatprep.subr.bf16.mxu0 0
    %218 = vmatpush1.bf16.msra.mxu0 0
    %219 = vmatprep.subr.bf16.mxu0 0
    %220 = vmatpush1.bf16.msra.mxu0 0
    %221 = vmatprep.subr.bf16.mxu0 0
    %222 = vmatpush1.bf16.msra.mxu0 0
    %223 = vmatprep.subr.bf16.mxu0 0
    %224 = vmatpush1.bf16.msra.mxu0 %v205
    %225 = vmatprep.subr.bf16.mxu0 0
    %226 = vmatpush1.bf16.msra.mxu0 %v204
    %227 = vmatprep.subr.bf16.mxu0 0
    %228 = vmatpush2.bf16.msra.mxu0 0
    %229 = vmatprep.subr.bf16.mxu0 0
    %230 = vmatpush2.bf16.msra.mxu0 0
    %231 = vmatprep.subr.bf16.mxu0 0
    %232 = vmatpush2.bf16.msra.mxu0 0
    %233 = vmatprep.subr.bf16.mxu0 0
    %234 = vmatpush2.bf16.msra.mxu0 0
    %235 = vmatprep.subr.bf16.mxu0 0
    %236 = vmatpush2.bf16.msra.mxu0 0
    %237 = vmatprep.subr.bf16.mxu0 0
    %238 = vmatpush2.bf16.msra.mxu0 0
    %239 = vmatprep.subr.bf16.mxu0 0
    %240 = vmatpush2.bf16.msra.mxu0 0
    %241 = vmatprep.subr.bf16.mxu0 0
    %242 = vmatpush2.bf16.msra.mxu0 0
    %243 = vmatprep.mubr.bf16.mxu0 0
    %244 = vmatmul.mubr.bf16.gmra.mxu0 %v209
    %v245 = vpop.f32.mrf.mxu0
    %v246 = vadd.f32 %v194, %v245
    %v247 = vpop.f32.mrf.mxu0
    %v248 = vpop.f32.mrf.mxu0
    %v249 = vadd.f32 %v194, %v248
    %v250 = vpop.f32.mrf.mxu0
    %251 = vdwg.mxu0
    %252 = vmax.xlane.f32.xlu0 %v246
    %v253 = vpop.xlane.xlu0 %252
    %254 = vmax.xlane.f32.xlu0 %v249
    %v255 = vpop.xlane.xlu0 %254
    %v256 = vsub.f32 %v246, %v253
    %v257 = vsub.f32 %v249, %v255
    %v258 = vmul.f32 %v256, 1.442695
    %v259 = vpow.pop %v258
    %v260 = vmul.f32 %v257, 1.442695
    %v261 = vpow.pop %v260
    %262 = vadd.xlane.f32.xlu0 %v259
    %v263 = vpop.xlane.xlu0 %262
    %264 = vadd.xlane.f32.xlu0 %v261
    %v265 = vpop.xlane.xlu0 %264
    %v266 = vlog2.pop %v263
    %v267 = vmul.f32 %v266, 0.6931472
    %v268 = vlog2.pop %v265
    %v269 = vmul.f32 %v268, 0.6931472
    %v270 = vadd.f32 %v267, %v253
    %v271 = vadd.f32 %v269, %v255
    %v272 = vlaneseq
    %v273 = vand.u32 %v272, 127
    %v274 = vld [vmem:[%s5] sm:$0xff]
    %v275 = vld [vmem:[%s5 + $0x8] sm:$0xff]
    %276 = vset.pattern.permute.xlu0 0
    %277 = vperm.xlu0 %276, %v274
    %v278 = vpop.permute.xlu0 %277
    %279 = vset.pattern.permute.xlu0 0
    %280 = vperm.xlu0 %279, %v275
    %v281 = vpop.permute.xlu0 %280
    %vm282 = vcmp.eq.s32.totalorder %v273, %v278
    %vm283 = vcmp.eq.s32.totalorder %v273, %v281
    %v284 = vsel %vm282, %v246, 0.0
    %v285 = vsel %vm283, %v249, 0.0
    %286 = vadd.xlane.f32.xlu0 %v284
    %v287 = vpop.xlane.xlu0 %286
    %288 = vadd.xlane.f32.xlu0 %v285
    %v289 = vpop.xlane.xlu0 %288
    %v290 = vsub.f32 %v270, %v287
    %v291 = vsub.f32 %v271, %v289
    %v292 = vlaneseq
    %v293 = vshrl.u32 %v292, 7
    %v294 = vadd.s32 %v293, 8
    %s295 = smul.u32 0, 16
    %v296 = vstv %s295
    %v297 = vadd.s32 %v293, %v296
    %v298 = vadd.s32 %v294, %v296
    %vm299 = vcmp.lt.s32.totalorder %v297, 2
    %vm300 = vcmp.lt.s32.totalorder %v298, 2
    %v301 = vsel %vm299, %v290, 0.0
    %v302 = vsel %vm300, %v291, 0.0
    %vm303 = vcmask 7168
    %v304 = vsel %vm303, %v301, 0.0
    %v305 = vsel %vm303, %v302, 0.0
    %v306 = vadd.f32 %v304, %v305
    %307 = vadd.xlane.f32.xlu0 %v306
    %v308 = vpop.xlane.xlu0 %307
    %v309 = vrot.slane %v308, 4
    %v310 = vadd.f32 %v308, %v309
    %v311 = vrot.slane %v310, 2
    %v312 = vadd.f32 %v310, %v311
    %v313 = vrot.slane %v312, 1
    %v314 = vadd.f32 %v312, %v313
    %s315 = vtos %v314
    %316 = vst [vmem:[#allocation8] sm:$0xff] %v246
    %317 = vst [vmem:[#allocation8 + $0x8] sm:$0xff] %v249
    %v318 = vstv %s315
    %319 = vst [vmem:[#allocation9] sm:$0xff] %v318
    // Predicated region
    $region38: #{tpu_custom_call.1} parent=1 // pred_check
      _
    $region39: #{tpu_custom_call.1} parent=1 // pred_check_branch
      %321 = sbr.rel (0) target = $region41
    $region40: #{tpu_custom_call.1} parent=1 // pred_region
      %s323 = ssub.s32 256, 256
      %324 = vsyncadd [#allocation4], %s323
      %s325 = sshll.u32 [#allocation8], 4
      %s326 = int_to_ptr.vmem [resolvable:$true] %s325
      %331 = dma.vmem_to_hbm [thread:$0]  %s326, 256, %s6, [#allocation4], 128, 128, 8
    $region41: #{tpu_custom_call.1} parent=1 // pred_fallthru
      _
    // Predicated region
    $region42: #{tpu_custom_call.1} parent=1 // pred_check
      _
    $region43: #{tpu_custom_call.1} parent=1 // pred_check_branch
      %333 = sbr.rel (0) target = $region45
    $region44: #{tpu_custom_call.1} parent=1 // pred_region
      %s335 = ssub.s32 128, 128
      %336 = vsyncadd [#allocation10], %s335
      %s338 = sshll.u32 [#allocation9], 4
      %s339 = int_to_ptr.vmem [resolvable:$true] %s338
      %341 = dma.vmem_to_hbm [thread:$0]  %s339, 128, %s7, [#allocation10]
    $region45: #{tpu_custom_call.1} parent=1 // pred_fallthru
      _
    // Predicated region
    $region46: #{tpu_custom_call.1} parent=1 // pred_check
      _
    $region47: #{tpu_custom_call.1} parent=1 // pred_check_branch
      %343 = sbr.rel (0) target = $region49
    $region48: #{tpu_custom_call.1} parent=1 // pred_region
      %344 = dma.done [#allocation4], 256
    $region49: #{tpu_custom_call.1} parent=1 // pred_fallthru
      _
    // Predicated region
    $region50: #{tpu_custom_call.1} parent=1 // pred_check
      _
    $region51: #{tpu_custom_call.1} parent=1 // pred_check_branch
      %346 = sbr.rel (0) target = $region53
    $region52: #{tpu_custom_call.1} parent=1 // pred_region
      %347 = dma.done [#allocation10], 128
    $region53: #{tpu_custom_call.1} parent=1 // pred_fallthru
      _
    %348 = vsyncpa [#allocation3], 1
    %349 = vsyncpa [#allocation6], 1
    %350 = vsyncpa [#allocation4], 1
    %351 = vsyncpa [#allocation10], 1

</llo_original>
